<compile_context>
chip_gen: v7x
topology: tpu7x:2x2x1
jax: 0.10.0
libtpu: 0.0.40
codegen_flags: <defaults>
</compile_context>

<pallas_src>
import jax
import jax.numpy as jnp
from jax import lax
from jax.experimental import pallas as pl
from jax.experimental.pallas import tpu as pltpu

F_IN = 6              # delay-buffer / external-input feature count
HID = 20              # fc1 hidden width
FW = HID + F_IN       # fused accumulator width: [h_pre (20) | db_new (6)]
GROUP = 8             # static unroll / store-batching factor (<= 8)


def _tree_add(xs):
    """Pairwise tree sum — keeps the per-step add depth at log2(n)."""
    xs = list(xs)
    while len(xs) > 1:
        nxt = [xs[i] + xs[i + 1] for i in range(0, len(xs) - 1, 2)]
        if len(xs) % 2:
            nxt.append(xs[-1])
        xs = nxt
    return xs[0]


def _make_kernel(B, nb):
    """nb = number of 8-step groups per chunk (Python int)."""

    def kernel(x_ref, p_ref, out_ref, u_scr, acc_scr, prev_scr):
        # x_ref  : (tc*B, 6)  chunk inputs, (time, batch) flattened on sublanes
        # p_ref  : (16, 32)   packed / pre-fused weights
        # out_ref: (tc*B, 1)  chunk outputs (same row order as the inputs)
        # u_scr  : (tc*B, 26) hoisted input term  [x@W1b^T + b1 | 0]
        # acc_scr: (B, 26)    cross-chunk state (cols 20:26 = delay buffer)
        # prev_scr:(B, 1)     cross-chunk previous output

        @pl.when(pl.program_id(0) == 0)
        def _init():
            acc_scr[...] = jnp.zeros_like(acc_scr)
            prev_scr[...] = jnp.zeros_like(prev_scr)

        # ---------- once-per-chunk prologue (off the recurrence chain) -------
        P = p_ref[...]
        wc = P[0:F_IN + 1, 0:FW]        # (7, 26) per-feature fused FMA rows
        b1p = P[7:8, 0:FW]              # (1, 26) [b1 | 0]
        w1bt = P[8:8 + F_IN, 0:FW]      # (6, 26) [W1b^T | 0]
        w2p = P[14:15, 0:FW]            # (1, 26) [W2 | 0]
        b2s = P[15:16, 0:1]             # (1, 1)

        # Hoist loop-invariant broadcasts (JAX does not CSE broadcast_in_dim).
        wc_b = [jnp.broadcast_to(wc[j:j + 1, :], (B, FW)) for j in range(F_IN + 1)]
        w2_b = jnp.broadcast_to(w2p, (B, FW))
        b2_b = jnp.broadcast_to(b2s, (B, 1))

        # U for the whole chunk in ONE matmul; cols 20:26 are zero because the
        # packed W1b^T / b1 rows are zero-padded there.
        u_scr[...] = (jnp.dot(x_ref[...], w1bt,
                              preferred_element_type=jnp.float32) + b1p)

        # ---------- time recurrence: state carried in vregs ------------------
        def group_body(g, carry):
            acc, prev = carry                         # (B, 26), (B, 1)
            gbase = g * (GROUP * B)
            if (GROUP * B) % 8 == 0:
                gbase = pl.multiple_of(gbase, 8)
            ug = u_scr[pl.ds(gbase, GROUP * B), :]    # one aligned load / group
            outs = []
            for i in range(GROUP):                    # static unroll (= 8)
                u = ug[i * B:(i + 1) * B, :]          # (B, 26) static slice
                terms = [u]
                for j in range(F_IN):                 # 6 + 1 broadcast-FMAs
                    terms.append(acc[:, HID + j:HID + j + 1] * wc_b[j])
                terms.append(prev * wc_b[F_IN])
                acc = _tree_add(terms)                # [:, :20]=h_pre [:,20:]=db_new
                s = jnp.tanh(acc)                     # 1 vreg -> 1 EUP push
                out = jnp.sum(s * w2_b, axis=1, keepdims=True) + b2_b   # (B, 1)
                outs.append(out)
                prev = out
            # One aligned full-sublane store per 8 steps (row order matches HBM).
            out_ref[pl.ds(gbase, GROUP * B), :] = jnp.concatenate(outs, axis=0)
            return acc, prev

        carry0 = (acc_scr[...], prev_scr[...])
        accf, prevf = lax.fori_loop(0, nb, group_body, carry0)
        acc_scr[...] = accf
        prev_scr[...] = prevf

    return kernel


def simulation_forward(inputs, Wx, Wu, W1, b1, W2, b2, *, tc=1024):
    """NARX forward (forceswitch = 0).

    inputs: (T, B, 6) f32.  Weights use the torch.nn.Linear convention:
      Wx (6,6), Wu (6,1), W1 (20,12), b1 (20,), W2 (1,20), b2 (1,).
    Returns outputs of shape (T, B, 1) f32.
    """
    f32 = jnp.float32
    T, B, F = inputs.shape
    assert F == F_IN

    Wx = Wx.astype(f32)
    Wu = Wu.astype(f32)
    W1 = W1.astype(f32)
    W2 = W2.astype(f32)
    b1 = b1.astype(f32)
    b2 = b2.astype(f32)

    W1a = W1[:, :F_IN]               # acts on the (updated) delay buffer
    W1b = W1[:, F_IN:]               # acts on the current input
    A_db = W1a @ Wx                  # (20, 6)  fused: W1a @ Wx
    A_prev = W1a @ Wu                # (20, 1)  fused: W1a @ Wu

    # Packed weight operand; every slice stays inside one 8-sublane tile.
    #   rows 0..5 : [A_db^T[j] | Wx^T[j]]   (per delay-buffer feature j)
    #   row  6    : [A_prev^T  | Wu^T]
    #   row  7    : [b1 | 0]
    #   rows 8..13: [W1b^T | 0]
    #   row  14   : [W2 | 0]
    #   row  15   : b2
    wc = jnp.concatenate(
        [jnp.concatenate([A_db.T, Wx.T], axis=1),
         jnp.concatenate([A_prev.T, Wu.T], axis=1)], axis=0)          # (7, 26)
    zF = jnp.zeros((1, F_IN), f32)
    b1p = jnp.concatenate([b1.reshape(1, HID), zF], axis=1)           # (1, 26)
    w1bt = jnp.concatenate([W1b.T, jnp.zeros((F_IN, F_IN), f32)], axis=1)  # (6, 26)
    w2p = jnp.concatenate([W2.reshape(1, HID), zF], axis=1)           # (1, 26)

    P = jnp.zeros((16, 32), f32)
    P = P.at[0:F_IN + 1, 0:FW].set(wc)
    P = P.at[7:8, 0:FW].set(b1p)
    P = P.at[8:8 + F_IN, 0:FW].set(w1bt)
    P = P.at[14:15, 0:FW].set(w2p)
    P = P.at[15, 0].set(b2.reshape(()))

    # Time-chunk sizing: multiple of GROUP, capped so that the (lane-padded)
    # per-chunk VMEM footprint (2x input + U + 2x output buffers, each
    # tc*B rows x 512 B) stays well under the explicit 32 MiB scoped limit
    # (safe on v5e/v6e/v7x alike).
    tc = max(GROUP, min(int(tc), 1024))
    tc_cap = max(GROUP, (24 * 1024 * 1024) // (5 * 512 * B))
    tc = min(tc, tc_cap)
    tc = min(tc, -(-T // GROUP) * GROUP)
    tc = -(-tc // GROUP) * GROUP
    T_pad = -(-T // tc) * tc
    n_chunks = T_pad // tc
    nb = tc // GROUP

    # (T, B, 6) -> (T*B, 6): contiguous HBM reads, aligned sublane groups of B.
    x_flat = inputs.astype(f32).reshape(T * B, F_IN)
    if T_pad != T:
        x_flat = jnp.pad(x_flat, ((0, (T_pad - T) * B), (0, 0)))

    out = pl.pallas_call(
        _make_kernel(B, nb),
        out_shape=jax.ShapeDtypeStruct((T_pad * B, 1), f32),
        grid_spec=pltpu.PrefetchScalarGridSpec(
            num_scalar_prefetch=0,
            grid=(n_chunks,),
            in_specs=[
                pl.BlockSpec((tc * B, F_IN), lambda c: (c, 0)),   # input chunk
                pl.BlockSpec((16, 32), lambda c: (0, 0)),         # packed weights
            ],
            out_specs=pl.BlockSpec((tc * B, 1), lambda c: (c, 0)),
            scratch_shapes=[
                pltpu.VMEM((tc * B, FW), f32),   # hoisted input term U
                pltpu.VMEM((B, FW), f32),        # acc carry (cols 20:26 = delay buf)
                pltpu.VMEM((B, 1), f32),         # previous-output carry
            ],
        ),
        compiler_params=pltpu.CompilerParams(
            # The time recurrence is sequential: the chunk axis must stay
            # "arbitrary" (scratch state persists across grid steps).
            dimension_semantics=("arbitrary",),
            vmem_limit_bytes=32 * 1024 * 1024),
    )(x_flat, P)

    return out[:T * B].reshape(T, B, 1)


def reference_forward(inputs, Wx, Wu, W1, b1, W2, b2):
    """Pure-JAX reference replicating the PyTorch forward (forceswitch = 0)."""
    B = inputs.shape[1]

    def step(carry, x_k):
        db, prev = carry
        db_new = db @ Wx.T + prev @ Wu.T
        ni = jnp.concatenate([db_new, x_k], axis=-1)
        s = jnp.tanh(ni @ W1.T + b1)
        o = s @ W2.T + b2
        return (db_new, o), o

    init = (jnp.zeros((B, 6), jnp.float32), jnp.zeros((B, 1), jnp.float32))
    _, outs = jax.lax.scan(step, init, inputs)
    return outs


if __name__ == "__main__":
    key = jax.random.PRNGKey(0)
    k_in, k_wx, k_wu, k_w1, k_b1, k_w2, k_b2 = jax.random.split(key, 7)

    T, B = 20, 8
    inputs = jax.random.normal(k_in, (T, B, 6), dtype=jnp.float32)

    # Deterministic parameter init (torch Linear convention: weight is (out, in)).
    Wx = 0.15 * jax.random.normal(k_wx, (6, 6), dtype=jnp.float32)   # DelayBuffer_x
    Wu = 0.30 * jax.random.normal(k_wu, (6, 1), dtype=jnp.float32)   # DelayBuffer_u
    W1 = 0.30 * jax.random.normal(k_w1, (20, 12), dtype=jnp.float32) # fc1 weight
    b1 = 0.10 * jax.random.normal(k_b1, (20,), dtype=jnp.float32)    # fc1 bias
    W2 = 0.30 * jax.random.normal(k_w2, (1, 20), dtype=jnp.float32)  # fc2 weight
    b2 = 0.10 * jax.random.normal(k_b2, (1,), dtype=jnp.float32)     # fc2 bias

    ref = jax.block_until_ready(reference_forward(inputs, Wx, Wu, W1, b1, W2, b2))

    # Small chunk (tc=8): exercises the multi-chunk + tail-padding path (3 chunks).
    out_small = jax.block_until_ready(
        simulation_forward(inputs, Wx, Wu, W1, b1, W2, b2, tc=8))
    assert out_small.shape == (T, B, 1)
    err_s = jnp.max(jnp.abs(out_small - ref))
    assert jnp.allclose(out_small, ref, atol=1e-4, rtol=1e-4), f"mismatch tc=8: {err_s}"

    # Default chunking: single chunk, several 8-step groups inside the kernel.
    out_default = jax.block_until_ready(
        simulation_forward(inputs, Wx, Wu, W1, b1, W2, b2))
    err_d = jnp.max(jnp.abs(out_default - ref))
    assert jnp.allclose(out_default, ref, atol=1e-4, rtol=1e-4), f"mismatch default: {err_d}"

    print("KERNEL_OK")
</pallas_src>

<mosaic_0001>
module attributes {stable_mosaic.version = 11 : i64} {
  func.func @kernel(%arg0: i32, %arg1: memref<64x6xf32, #tpu.memory_space<vmem>>, %arg2: memref<16x32xf32, #tpu.memory_space<vmem>>, %arg3: memref<64x1xf32, #tpu.memory_space<vmem>>, %arg4: memref<64x26xf32, #tpu.memory_space<vmem>>, %arg5: memref<8x26xf32, #tpu.memory_space<vmem>>, %arg6: memref<8x1xf32, #tpu.memory_space<vmem>>) attributes {dimension_semantics = [#tpu.dimension_semantics<arbitrary>], iteration_bounds = array<i64: 3>, scalar_prefetch = 0 : i64, scratch_operands = 3 : i64, tpu.core_type = #tpu.core_type<tc>, window_params = [{transform_indices = @transform_0, window_bounds = array<i64: 64, 6>}, {pipeline_mode = #tpu.pipeline_mode<synchronous>, transform_indices = @transform_1, window_bounds = array<i64: 16, 32>}, {transform_indices = @transform_2, window_bounds = array<i64: 64, 1>}]} {
    %c0_i32 = arith.constant 0 : i32
    %0 = arith.cmpi eq, %arg0, %c0_i32 : i32
    %1 = arith.extui %0 : i1 to i32
    %c0_i32_0 = arith.constant 0 : i32
    %2 = arith.cmpi ne, %1, %c0_i32_0 : i32
    scf.if %2 {
      %cst_25 = arith.constant 0.000000e+00 : f32
      %314 = vector.broadcast %cst_25 : f32 to vector<8x26xf32>
      %c0_26 = arith.constant 0 : index
      %c0_27 = arith.constant 0 : index
      %315 = vector.load %arg5[%c0_26, %c0_27] : memref<8x26xf32, #tpu.memory_space<vmem>>, vector<8x26xf32>
      tpu.vector_store %arg5[%c0_26, %c0_27], %314 {strides = array<i32>} : memref<8x26xf32, #tpu.memory_space<vmem>>, vector<8x26xf32>,
      %cst_28 = arith.constant 0.000000e+00 : f32
      %316 = vector.broadcast %cst_28 : f32 to vector<8x1xf32>
      %c0_29 = arith.constant 0 : index
      %c0_30 = arith.constant 0 : index
      %317 = vector.load %arg6[%c0_29, %c0_30] : memref<8x1xf32, #tpu.memory_space<vmem>>, vector<8x1xf32>
      tpu.vector_store %arg6[%c0_29, %c0_30], %316 {strides = array<i32>} : memref<8x1xf32, #tpu.memory_space<vmem>>, vector<8x1xf32>,
    } else {
    }
    %c0 = arith.constant 0 : index
    %c0_1 = arith.constant 0 : index
    %3 = vector.load %arg2[%c0, %c0_1] : memref<16x32xf32, #tpu.memory_space<vmem>>, vector<16x32xf32>
    %4 = vector.extract_strided_slice %3 {offsets = [0, 0], sizes = [7, 26], strides = [1, 1]} : vector<16x32xf32> to vector<7x26xf32>
    %5 = vector.extract_strided_slice %3 {offsets = [7, 0], sizes = [1, 26], strides = [1, 1]} : vector<16x32xf32> to vector<1x26xf32>
    %6 = vector.extract_strided_slice %3 {offsets = [8, 0], sizes = [6, 26], strides = [1, 1]} : vector<16x32xf32> to vector<6x26xf32>
    %7 = vector.extract_strided_slice %3 {offsets = [14, 0], sizes = [1, 26], strides = [1, 1]} : vector<16x32xf32> to vector<1x26xf32>
    %8 = vector.extract_strided_slice %3 {offsets = [15, 0], sizes = [1, 1], strides = [1, 1]} : vector<16x32xf32> to vector<1x1xf32>
    %9 = vector.extract_strided_slice %4 {offsets = [0, 0], sizes = [1, 26], strides = [1, 1]} : vector<7x26xf32> to vector<1x26xf32>
    %10 = vector.shape_cast %9 : vector<1x26xf32> to vector<1x26xf32>
    %11 = vector.broadcast %10 : vector<1x26xf32> to vector<8x26xf32>
    %12 = vector.extract_strided_slice %4 {offsets = [1, 0], sizes = [1, 26], strides = [1, 1]} : vector<7x26xf32> to vector<1x26xf32>
    %13 = vector.shape_cast %12 : vector<1x26xf32> to vector<1x26xf32>
    %14 = vector.broadcast %13 : vector<1x26xf32> to vector<8x26xf32>
    %15 = vector.extract_strided_slice %4 {offsets = [2, 0], sizes = [1, 26], strides = [1, 1]} : vector<7x26xf32> to vector<1x26xf32>
    %16 = vector.shape_cast %15 : vector<1x26xf32> to vector<1x26xf32>
    %17 = vector.broadcast %16 : vector<1x26xf32> to vector<8x26xf32>
    %18 = vector.extract_strided_slice %4 {offsets = [3, 0], sizes = [1, 26], strides = [1, 1]} : vector<7x26xf32> to vector<1x26xf32>
    %19 = vector.shape_cast %18 : vector<1x26xf32> to vector<1x26xf32>
    %20 = vector.broadcast %19 : vector<1x26xf32> to vector<8x26xf32>
    %21 = vector.extract_strided_slice %4 {offsets = [4, 0], sizes = [1, 26], strides = [1, 1]} : vector<7x26xf32> to vector<1x26xf32>
    %22 = vector.shape_cast %21 : vector<1x26xf32> to vector<1x26xf32>
    %23 = vector.broadcast %22 : vector<1x26xf32> to vector<8x26xf32>
    %24 = vector.extract_strided_slice %4 {offsets = [5, 0], sizes = [1, 26], strides = [1, 1]} : vector<7x26xf32> to vector<1x26xf32>
    %25 = vector.shape_cast %24 : vector<1x26xf32> to vector<1x26xf32>
    %26 = vector.broadcast %25 : vector<1x26xf32> to vector<8x26xf32>
    %27 = vector.extract_strided_slice %4 {offsets = [6, 0], sizes = [1, 26], strides = [1, 1]} : vector<7x26xf32> to vector<1x26xf32>
    %28 = vector.shape_cast %27 : vector<1x26xf32> to vector<1x26xf32>
    %29 = vector.broadcast %28 : vector<1x26xf32> to vector<8x26xf32>
    %30 = vector.shape_cast %7 : vector<1x26xf32> to vector<1x26xf32>
    %31 = vector.broadcast %30 : vector<1x26xf32> to vector<8x26xf32>
    %32 = vector.shape_cast %8 : vector<1x1xf32> to vector<1x1xf32>
    %33 = vector.broadcast %32 : vector<1x1xf32> to vector<8x1xf32>
    %c0_2 = arith.constant 0 : index
    %c0_3 = arith.constant 0 : index
    %34 = vector.load %arg1[%c0_2, %c0_3] : memref<64x6xf32, #tpu.memory_space<vmem>>, vector<64x6xf32>
    %cst = arith.constant dense<0.000000e+00> : vector<64x26xf32>
    %35 = tpu.matmul %34, %6, %cst {dimension_numbers = #tpu.dot_dimension_numbers<[1], [0], [0], [1], [0, 0, 1, 1], [], []>} : vector<64x6xf32>, vector<6x26xf32>, vector<64x26xf32> -> vector<64x26xf32>
    %36 = vector.broadcast %5 : vector<1x26xf32> to vector<64x26xf32>
    %37 = arith.addf %35, %36 : vector<64x26xf32>
    %c0_4 = arith.constant 0 : index
    %c0_5 = arith.constant 0 : index
    %38 = vector.load %arg4[%c0_4, %c0_5] : memref<64x26xf32, #tpu.memory_space<vmem>>, vector<64x26xf32>
    tpu.vector_store %arg4[%c0_4, %c0_5], %37 {strides = array<i32>} : memref<64x26xf32, #tpu.memory_space<vmem>>, vector<64x26xf32>,
    %c0_6 = arith.constant 0 : index
    %c0_7 = arith.constant 0 : index
    %39 = vector.load %arg5[%c0_6, %c0_7] : memref<8x26xf32, #tpu.memory_space<vmem>>, vector<8x26xf32>
    %c0_8 = arith.constant 0 : index
    %c0_9 = arith.constant 0 : index
    %40 = vector.load %arg6[%c0_8, %c0_9] : memref<8x1xf32, #tpu.memory_space<vmem>>, vector<8x1xf32>
    %c0_i32_10 = arith.constant 0 : i32
    %c64_i32 = arith.constant 64 : i32
    %41 = arith.muli %c0_i32_10, %c64_i32 : i32
    %42 = tpu.assume_multiple %41, 8 : i32
    %43 = arith.index_cast %42 : i32 to index
    %c0_11 = arith.constant 0 : index
    %44 = vector.load %arg4[%43, %c0_11] : memref<64x26xf32, #tpu.memory_space<vmem>>, vector<64x26xf32>
    %45 = vector.extract_strided_slice %44 {offsets = [0, 0], sizes = [8, 26], strides = [1, 1]} : vector<64x26xf32> to vector<8x26xf32>
    %46 = vector.extract_strided_slice %39 {offsets = [0, 20], sizes = [8, 1], strides = [1, 1]} : vector<8x26xf32> to vector<8x1xf32>
    %47 = vector.broadcast %46 : vector<8x1xf32> to vector<8x26xf32>
    %48 = arith.mulf %47, %11 : vector<8x26xf32>
    %49 = vector.extract_strided_slice %39 {offsets = [0, 21], sizes = [8, 1], strides = [1, 1]} : vector<8x26xf32> to vector<8x1xf32>
    %50 = vector.broadcast %49 : vector<8x1xf32> to vector<8x26xf32>
    %51 = arith.mulf %50, %14 : vector<8x26xf32>
    %52 = vector.extract_strided_slice %39 {offsets = [0, 22], sizes = [8, 1], strides = [1, 1]} : vector<8x26xf32> to vector<8x1xf32>
    %53 = vector.broadcast %52 : vector<8x1xf32> to vector<8x26xf32>
    %54 = arith.mulf %53, %17 : vector<8x26xf32>
    %55 = vector.extract_strided_slice %39 {offsets = [0, 23], sizes = [8, 1], strides = [1, 1]} : vector<8x26xf32> to vector<8x1xf32>
    %56 = vector.broadcast %55 : vector<8x1xf32> to vector<8x26xf32>
    %57 = arith.mulf %56, %20 : vector<8x26xf32>
    %58 = vector.extract_strided_slice %39 {offsets = [0, 24], sizes = [8, 1], strides = [1, 1]} : vector<8x26xf32> to vector<8x1xf32>
    %59 = vector.broadcast %58 : vector<8x1xf32> to vector<8x26xf32>
    %60 = arith.mulf %59, %23 : vector<8x26xf32>
    %61 = vector.extract_strided_slice %39 {offsets = [0, 25], sizes = [8, 1], strides = [1, 1]} : vector<8x26xf32> to vector<8x1xf32>
    %62 = vector.broadcast %61 : vector<8x1xf32> to vector<8x26xf32>
    %63 = arith.mulf %62, %26 : vector<8x26xf32>
    %64 = vector.broadcast %40 : vector<8x1xf32> to vector<8x26xf32>
    %65 = arith.mulf %64, %29 : vector<8x26xf32>
    %66 = arith.addf %45, %48 : vector<8x26xf32>
    %67 = arith.addf %51, %54 : vector<8x26xf32>
    %68 = arith.addf %57, %60 : vector<8x26xf32>
    %69 = arith.addf %63, %65 : vector<8x26xf32>
    %70 = arith.addf %66, %67 : vector<8x26xf32>
    %71 = arith.addf %68, %69 : vector<8x26xf32>
    %72 = arith.addf %70, %71 : vector<8x26xf32>
    %73 = math.tanh %72 : vector<8x26xf32>
    %74 = arith.mulf %73, %31 : vector<8x26xf32>
    %cst_12 = arith.constant dense<0.000000e+00> : vector<8xf32>
    %75 = vector.multi_reduction <add>, %74, %cst_12 [1] : vector<8x26xf32> to vector<8xf32>
    %76 = vector.shape_cast %75 : vector<8xf32> to vector<8x1xf32>
    %77 = arith.addf %76, %33 : vector<8x1xf32>
    %78 = vector.extract_strided_slice %44 {offsets = [8, 0], sizes = [8, 26], strides = [1, 1]} : vector<64x26xf32> to vector<8x26xf32>
    %79 = vector.extract_strided_slice %72 {offsets = [0, 20], sizes = [8, 1], strides = [1, 1]} : vector<8x26xf32> to vector<8x1xf32>
    %80 = vector.broadcast %79 : vector<8x1xf32> to vector<8x26xf32>
    %81 = arith.mulf %80, %11 : vector<8x26xf32>
    %82 = vector.extract_strided_slice %72 {offsets = [0, 21], sizes = [8, 1], strides = [1, 1]} : vector<8x26xf32> to vector<8x1xf32>
    %83 = vector.broadcast %82 : vector<8x1xf32> to vector<8x26xf32>
    %84 = arith.mulf %83, %14 : vector<8x26xf32>
    %85 = vector.extract_strided_slice %72 {offsets = [0, 22], sizes = [8, 1], strides = [1, 1]} : vector<8x26xf32> to vector<8x1xf32>
    %86 = vector.broadcast %85 : vector<8x1xf32> to vector<8x26xf32>
    %87 = arith.mulf %86, %17 : vector<8x26xf32>
    %88 = vector.extract_strided_slice %72 {offsets = [0, 23], sizes = [8, 1], strides = [1, 1]} : vector<8x26xf32> to vector<8x1xf32>
    %89 = vector.broadcast %88 : vector<8x1xf32> to vector<8x26xf32>
    %90 = arith.mulf %89, %20 : vector<8x26xf32>
    %91 = vector.extract_strided_slice %72 {offsets = [0, 24], sizes = [8, 1], strides = [1, 1]} : vector<8x26xf32> to vector<8x1xf32>
    %92 = vector.broadcast %91 : vector<8x1xf32> to vector<8x26xf32>
    %93 = arith.mulf %92, %23 : vector<8x26xf32>
    %94 = vector.extract_strided_slice %72 {offsets = [0, 25], sizes = [8, 1], strides = [1, 1]} : vector<8x26xf32> to vector<8x1xf32>
    %95 = vector.broadcast %94 : vector<8x1xf32> to vector<8x26xf32>
    %96 = arith.mulf %95, %26 : vector<8x26xf32>
    %97 = vector.broadcast %77 : vector<8x1xf32> to vector<8x26xf32>
    %98 = arith.mulf %97, %29 : vector<8x26xf32>
    %99 = arith.addf %78, %81 : vector<8x26xf32>
    %100 = arith.addf %84, %87 : vector<8x26xf32>
    %101 = arith.addf %90, %93 : vector<8x26xf32>
    %102 = arith.addf %96, %98 : vector<8x26xf32>
    %103 = arith.addf %99, %100 : vector<8x26xf32>
    %104 = arith.addf %101, %102 : vector<8x26xf32>
    %105 = arith.addf %103, %104 : vector<8x26xf32>
    %106 = math.tanh %105 : vector<8x26xf32>
    %107 = arith.mulf %106, %31 : vector<8x26xf32>
    %cst_13 = arith.constant dense<0.000000e+00> : vector<8xf32>
    %108 = vector.multi_reduction <add>, %107, %cst_13 [1] : vector<8x26xf32> to vector<8xf32>
    %109 = vector.shape_cast %108 : vector<8xf32> to vector<8x1xf32>
    %110 = arith.addf %109, %33 : vector<8x1xf32>
    %111 = vector.extract_strided_slice %44 {offsets = [16, 0], sizes = [8, 26], strides = [1, 1]} : vector<64x26xf32> to vector<8x26xf32>
    %112 = vector.extract_strided_slice %105 {offsets = [0, 20], sizes = [8, 1], strides = [1, 1]} : vector<8x26xf32> to vector<8x1xf32>
    %113 = vector.broadcast %112 : vector<8x1xf32> to vector<8x26xf32>
    %114 = arith.mulf %113, %11 : vector<8x26xf32>
    %115 = vector.extract_strided_slice %105 {offsets = [0, 21], sizes = [8, 1], strides = [1, 1]} : vector<8x26xf32> to vector<8x1xf32>
    %116 = vector.broadcast %115 : vector<8x1xf32> to vector<8x26xf32>
    %117 = arith.mulf %116, %14 : vector<8x26xf32>
    %118 = vector.extract_strided_slice %105 {offsets = [0, 22], sizes = [8, 1], strides = [1, 1]} : vector<8x26xf32> to vector<8x1xf32>
    %119 = vector.broadcast %118 : vector<8x1xf32> to vector<8x26xf32>
    %120 = arith.mulf %119, %17 : vector<8x26xf32>
    %121 = vector.extract_strided_slice %105 {offsets = [0, 23], sizes = [8, 1], strides = [1, 1]} : vector<8x26xf32> to vector<8x1xf32>
    %122 = vector.broadcast %121 : vector<8x1xf32> to vector<8x26xf32>
    %123 = arith.mulf %122, %20 : vector<8x26xf32>
    %124 = vector.extract_strided_slice %105 {offsets = [0, 24], sizes = [8, 1], strides = [1, 1]} : vector<8x26xf32> to vector<8x1xf32>
    %125 = vector.broadcast %124 : vector<8x1xf32> to vector<8x26xf32>
    %126 = arith.mulf %125, %23 : vector<8x26xf32>
    %127 = vector.extract_strided_slice %105 {offsets = [0, 25], sizes = [8, 1], strides = [1, 1]} : vector<8x26xf32> to vector<8x1xf32>
    %128 = vector.broadcast %127 : vector<8x1xf32> to vector<8x26xf32>
    %129 = arith.mulf %128, %26 : vector<8x26xf32>
    %130 = vector.broadcast %110 : vector<8x1xf32> to vector<8x26xf32>
    %131 = arith.mulf %130, %29 : vector<8x26xf32>
    %132 = arith.addf %111, %114 : vector<8x26xf32>
    %133 = arith.addf %117, %120 : vector<8x26xf32>
    %134 = arith.addf %123, %126 : vector<8x26xf32>
    %135 = arith.addf %129, %131 : vector<8x26xf32>
    %136 = arith.addf %132, %133 : vector<8x26xf32>
    %137 = arith.addf %134, %135 : vector<8x26xf32>
    %138 = arith.addf %136, %137 : vector<8x26xf32>
    %139 = math.tanh %138 : vector<8x26xf32>
    %140 = arith.mulf %139, %31 : vector<8x26xf32>
    %cst_14 = arith.constant dense<0.000000e+00> : vector<8xf32>
    %141 = vector.multi_reduction <add>, %140, %cst_14 [1] : vector<8x26xf32> to vector<8xf32>
    %142 = vector.shape_cast %141 : vector<8xf32> to vector<8x1xf32>
    %143 = arith.addf %142, %33 : vector<8x1xf32>
    %144 = vector.extract_strided_slice %44 {offsets = [24, 0], sizes = [8, 26], strides = [1, 1]} : vector<64x26xf32> to vector<8x26xf32>
    %145 = vector.extract_strided_slice %138 {offsets = [0, 20], sizes = [8, 1], strides = [1, 1]} : vector<8x26xf32> to vector<8x1xf32>
    %146 = vector.broadcast %145 : vector<8x1xf32> to vector<8x26xf32>
    %147 = arith.mulf %146, %11 : vector<8x26xf32>
    %148 = vector.extract_strided_slice %138 {offsets = [0, 21], sizes = [8, 1], strides = [1, 1]} : vector<8x26xf32> to vector<8x1xf32>
    %149 = vector.broadcast %148 : vector<8x1xf32> to vector<8x26xf32>
    %150 = arith.mulf %149, %14 : vector<8x26xf32>
    %151 = vector.extract_strided_slice %138 {offsets = [0, 22], sizes = [8, 1], strides = [1, 1]} : vector<8x26xf32> to vector<8x1xf32>
    %152 = vector.broadcast %151 : vector<8x1xf32> to vector<8x26xf32>
    %153 = arith.mulf %152, %17 : vector<8x26xf32>
    %154 = vector.extract_strided_slice %138 {offsets = [0, 23], sizes = [8, 1], strides = [1, 1]} : vector<8x26xf32> to vector<8x1xf32>
    %155 = vector.broadcast %154 : vector<8x1xf32> to vector<8x26xf32>
    %156 = arith.mulf %155, %20 : vector<8x26xf32>
    %157 = vector.extract_strided_slice %138 {offsets = [0, 24], sizes = [8, 1], strides = [1, 1]} : vector<8x26xf32> to vector<8x1xf32>
    %158 = vector.broadcast %157 : vector<8x1xf32> to vector<8x26xf32>
    %159 = arith.mulf %158, %23 : vector<8x26xf32>
    %160 = vector.extract_strided_slice %138 {offsets = [0, 25], sizes = [8, 1], strides = [1, 1]} : vector<8x26xf32> to vector<8x1xf32>
    %161 = vector.broadcast %160 : vector<8x1xf32> to vector<8x26xf32>
    %162 = arith.mulf %161, %26 : vector<8x26xf32>
    %163 = vector.broadcast %143 : vector<8x1xf32> to vector<8x26xf32>
    %164 = arith.mulf %163, %29 : vector<8x26xf32>
    %165 = arith.addf %144, %147 : vector<8x26xf32>
    %166 = arith.addf %150, %153 : vector<8x26xf32>
    %167 = arith.addf %156, %159 : vector<8x26xf32>
    %168 = arith.addf %162, %164 : vector<8x26xf32>
    %169 = arith.addf %165, %166 : vector<8x26xf32>
    %170 = arith.addf %167, %168 : vector<8x26xf32>
    %171 = arith.addf %169, %170 : vector<8x26xf32>
    %172 = math.tanh %171 : vector<8x26xf32>
    %173 = arith.mulf %172, %31 : vector<8x26xf32>
    %cst_15 = arith.constant dense<0.000000e+00> : vector<8xf32>
    %174 = vector.multi_reduction <add>, %173, %cst_15 [1] : vector<8x26xf32> to vector<8xf32>
    %175 = vector.shape_cast %174 : vector<8xf32> to vector<8x1xf32>
    %176 = arith.addf %175, %33 : vector<8x1xf32>
    %177 = vector.extract_strided_slice %44 {offsets = [32, 0], sizes = [8, 26], strides = [1, 1]} : vector<64x26xf32> to vector<8x26xf32>
    %178 = vector.extract_strided_slice %171 {offsets = [0, 20], sizes = [8, 1], strides = [1, 1]} : vector<8x26xf32> to vector<8x1xf32>
    %179 = vector.broadcast %178 : vector<8x1xf32> to vector<8x26xf32>
    %180 = arith.mulf %179, %11 : vector<8x26xf32>
    %181 = vector.extract_strided_slice %171 {offsets = [0, 21], sizes = [8, 1], strides = [1, 1]} : vector<8x26xf32> to vector<8x1xf32>
    %182 = vector.broadcast %181 : vector<8x1xf32> to vector<8x26xf32>
    %183 = arith.mulf %182, %14 : vector<8x26xf32>
    %184 = vector.extract_strided_slice %171 {offsets = [0, 22], sizes = [8, 1], strides = [1, 1]} : vector<8x26xf32> to vector<8x1xf32>
    %185 = vector.broadcast %184 : vector<8x1xf32> to vector<8x26xf32>
    %186 = arith.mulf %185, %17 : vector<8x26xf32>
    %187 = vector.extract_strided_slice %171 {offsets = [0, 23], sizes = [8, 1], strides = [1, 1]} : vector<8x26xf32> to vector<8x1xf32>
    %188 = vector.broadcast %187 : vector<8x1xf32> to vector<8x26xf32>
    %189 = arith.mulf %188, %20 : vector<8x26xf32>
    %190 = vector.extract_strided_slice %171 {offsets = [0, 24], sizes = [8, 1], strides = [1, 1]} : vector<8x26xf32> to vector<8x1xf32>
    %191 = vector.broadcast %190 : vector<8x1xf32> to vector<8x26xf32>
    %192 = arith.mulf %191, %23 : vector<8x26xf32>
    %193 = vector.extract_strided_slice %171 {offsets = [0, 25], sizes = [8, 1], strides = [1, 1]} : vector<8x26xf32> to vector<8x1xf32>
    %194 = vector.broadcast %193 : vector<8x1xf32> to vector<8x26xf32>
    %195 = arith.mulf %194, %26 : vector<8x26xf32>
    %196 = vector.broadcast %176 : vector<8x1xf32> to vector<8x26xf32>
    %197 = arith.mulf %196, %29 : vector<8x26xf32>
    %198 = arith.addf %177, %180 : vector<8x26xf32>
    %199 = arith.addf %183, %186 : vector<8x26xf32>
    %200 = arith.addf %189, %192 : vector<8x26xf32>
    %201 = arith.addf %195, %197 : vector<8x26xf32>
    %202 = arith.addf %198, %199 : vector<8x26xf32>
    %203 = arith.addf %200, %201 : vector<8x26xf32>
    %204 = arith.addf %202, %203 : vector<8x26xf32>
    %205 = math.tanh %204 : vector<8x26xf32>
    %206 = arith.mulf %205, %31 : vector<8x26xf32>
    %cst_16 = arith.constant dense<0.000000e+00> : vector<8xf32>
    %207 = vector.multi_reduction <add>, %206, %cst_16 [1] : vector<8x26xf32> to vector<8xf32>
    %208 = vector.shape_cast %207 : vector<8xf32> to vector<8x1xf32>
    %209 = arith.addf %208, %33 : vector<8x1xf32>
    %210 = vector.extract_strided_slice %44 {offsets = [40, 0], sizes = [8, 26], strides = [1, 1]} : vector<64x26xf32> to vector<8x26xf32>
    %211 = vector.extract_strided_slice %204 {offsets = [0, 20], sizes = [8, 1], strides = [1, 1]} : vector<8x26xf32> to vector<8x1xf32>
    %212 = vector.broadcast %211 : vector<8x1xf32> to vector<8x26xf32>
    %213 = arith.mulf %212, %11 : vector<8x26xf32>
    %214 = vector.extract_strided_slice %204 {offsets = [0, 21], sizes = [8, 1], strides = [1, 1]} : vector<8x26xf32> to vector<8x1xf32>
    %215 = vector.broadcast %214 : vector<8x1xf32> to vector<8x26xf32>
    %216 = arith.mulf %215, %14 : vector<8x26xf32>
    %217 = vector.extract_strided_slice %204 {offsets = [0, 22], sizes = [8, 1], strides = [1, 1]} : vector<8x26xf32> to vector<8x1xf32>
    %218 = vector.broadcast %217 : vector<8x1xf32> to vector<8x26xf32>
    %219 = arith.mulf %218, %17 : vector<8x26xf32>
    %220 = vector.extract_strided_slice %204 {offsets = [0, 23], sizes = [8, 1], strides = [1, 1]} : vector<8x26xf32> to vector<8x1xf32>
    %221 = vector.broadcast %220 : vector<8x1xf32> to vector<8x26xf32>
    %222 = arith.mulf %221, %20 : vector<8x26xf32>
    %223 = vector.extract_strided_slice %204 {offsets = [0, 24], sizes = [8, 1], strides = [1, 1]} : vector<8x26xf32> to vector<8x1xf32>
    %224 = vector.broadcast %223 : vector<8x1xf32> to vector<8x26xf32>
    %225 = arith.mulf %224, %23 : vector<8x26xf32>
    %226 = vector.extract_strided_slice %204 {offsets = [0, 25], sizes = [8, 1], strides = [1, 1]} : vector<8x26xf32> to vector<8x1xf32>
    %227 = vector.broadcast %226 : vector<8x1xf32> to vector<8x26xf32>
    %228 = arith.mulf %227, %26 : vector<8x26xf32>
    %229 = vector.broadcast %209 : vector<8x1xf32> to vector<8x26xf32>
    %230 = arith.mulf %229, %29 : vector<8x26xf32>
    %231 = arith.addf %210, %213 : vector<8x26xf32>
    %232 = arith.addf %216, %219 : vector<8x26xf32>
    %233 = arith.addf %222, %225 : vector<8x26xf32>
    %234 = arith.addf %228, %230 : vector<8x26xf32>
    %235 = arith.addf %231, %232 : vector<8x26xf32>
    %236 = arith.addf %233, %234 : vector<8x26xf32>
    %237 = arith.addf %235, %236 : vector<8x26xf32>
    %238 = math.tanh %237 : vector<8x26xf32>
    %239 = arith.mulf %238, %31 : vector<8x26xf32>
    %cst_17 = arith.constant dense<0.000000e+00> : vector<8xf32>
    %240 = vector.multi_reduction <add>, %239, %cst_17 [1] : vector<8x26xf32> to vector<8xf32>
    %241 = vector.shape_cast %240 : vector<8xf32> to vector<8x1xf32>
    %242 = arith.addf %241, %33 : vector<8x1xf32>
    %243 = vector.extract_strided_slice %44 {offsets = [48, 0], sizes = [8, 26], strides = [1, 1]} : vector<64x26xf32> to vector<8x26xf32>
    %244 = vector.extract_strided_slice %237 {offsets = [0, 20], sizes = [8, 1], strides = [1, 1]} : vector<8x26xf32> to vector<8x1xf32>
    %245 = vector.broadcast %244 : vector<8x1xf32> to vector<8x26xf32>
    %246 = arith.mulf %245, %11 : vector<8x26xf32>
    %247 = vector.extract_strided_slice %237 {offsets = [0, 21], sizes = [8, 1], strides = [1, 1]} : vector<8x26xf32> to vector<8x1xf32>
    %248 = vector.broadcast %247 : vector<8x1xf32> to vector<8x26xf32>
    %249 = arith.mulf %248, %14 : vector<8x26xf32>
    %250 = vector.extract_strided_slice %237 {offsets = [0, 22], sizes = [8, 1], strides = [1, 1]} : vector<8x26xf32> to vector<8x1xf32>
    %251 = vector.broadcast %250 : vector<8x1xf32> to vector<8x26xf32>
    %252 = arith.mulf %251, %17 : vector<8x26xf32>
    %253 = vector.extract_strided_slice %237 {offsets = [0, 23], sizes = [8, 1], strides = [1, 1]} : vector<8x26xf32> to vector<8x1xf32>
    %254 = vector.broadcast %253 : vector<8x1xf32> to vector<8x26xf32>
    %255 = arith.mulf %254, %20 : vector<8x26xf32>
    %256 = vector.extract_strided_slice %237 {offsets = [0, 24], sizes = [8, 1], strides = [1, 1]} : vector<8x26xf32> to vector<8x1xf32>
    %257 = vector.broadcast %256 : vector<8x1xf32> to vector<8x26xf32>
    %258 = arith.mulf %257, %23 : vector<8x26xf32>
    %259 = vector.extract_strided_slice %237 {offsets = [0, 25], sizes = [8, 1], strides = [1, 1]} : vector<8x26xf32> to vector<8x1xf32>
    %260 = vector.broadcast %259 : vector<8x1xf32> to vector<8x26xf32>
    %261 = arith.mulf %260, %26 : vector<8x26xf32>
    %262 = vector.broadcast %242 : vector<8x1xf32> to vector<8x26xf32>
    %263 = arith.mulf %262, %29 : vector<8x26xf32>
    %264 = arith.addf %243, %246 : vector<8x26xf32>
    %265 = arith.addf %249, %252 : vector<8x26xf32>
    %266 = arith.addf %255, %258 : vector<8x26xf32>
    %267 = arith.addf %261, %263 : vector<8x26xf32>
    %268 = arith.addf %264, %265 : vector<8x26xf32>
    %269 = arith.addf %266, %267 : vector<8x26xf32>
    %270 = arith.addf %268, %269 : vector<8x26xf32>
    %271 = math.tanh %270 : vector<8x26xf32>
    %272 = arith.mulf %271, %31 : vector<8x26xf32>
    %cst_18 = arith.constant dense<0.000000e+00> : vector<8xf32>
    %273 = vector.multi_reduction <add>, %272, %cst_18 [1] : vector<8x26xf32> to vector<8xf32>
    %274 = vector.shape_cast %273 : vector<8xf32> to vector<8x1xf32>
    %275 = arith.addf %274, %33 : vector<8x1xf32>
    %276 = vector.extract_strided_slice %44 {offsets = [56, 0], sizes = [8, 26], strides = [1, 1]} : vector<64x26xf32> to vector<8x26xf32>
    %277 = vector.extract_strided_slice %270 {offsets = [0, 20], sizes = [8, 1], strides = [1, 1]} : vector<8x26xf32> to vector<8x1xf32>
    %278 = vector.broadcast %277 : vector<8x1xf32> to vector<8x26xf32>
    %279 = arith.mulf %278, %11 : vector<8x26xf32>
    %280 = vector.extract_strided_slice %270 {offsets = [0, 21], sizes = [8, 1], strides = [1, 1]} : vector<8x26xf32> to vector<8x1xf32>
    %281 = vector.broadcast %280 : vector<8x1xf32> to vector<8x26xf32>
    %282 = arith.mulf %281, %14 : vector<8x26xf32>
    %283 = vector.extract_strided_slice %270 {offsets = [0, 22], sizes = [8, 1], strides = [1, 1]} : vector<8x26xf32> to vector<8x1xf32>
    %284 = vector.broadcast %283 : vector<8x1xf32> to vector<8x26xf32>
    %285 = arith.mulf %284, %17 : vector<8x26xf32>
    %286 = vector.extract_strided_slice %270 {offsets = [0, 23], sizes = [8, 1], strides = [1, 1]} : vector<8x26xf32> to vector<8x1xf32>
    %287 = vector.broadcast %286 : vector<8x1xf32> to vector<8x26xf32>
    %288 = arith.mulf %287, %20 : vector<8x26xf32>
    %289 = vector.extract_strided_slice %270 {offsets = [0, 24], sizes = [8, 1], strides = [1, 1]} : vector<8x26xf32> to vector<8x1xf32>
    %290 = vector.broadcast %289 : vector<8x1xf32> to vector<8x26xf32>
    %291 = arith.mulf %290, %23 : vector<8x26xf32>
    %292 = vector.extract_strided_slice %270 {offsets = [0, 25], sizes = [8, 1], strides = [1, 1]} : vector<8x26xf32> to vector<8x1xf32>
    %293 = vector.broadcast %292 : vector<8x1xf32> to vector<8x26xf32>
    %294 = arith.mulf %293, %26 : vector<8x26xf32>
    %295 = vector.broadcast %275 : vector<8x1xf32> to vector<8x26xf32>
    %296 = arith.mulf %295, %29 : vector<8x26xf32>
    %297 = arith.addf %276, %279 : vector<8x26xf32>
    %298 = arith.addf %282, %285 : vector<8x26xf32>
    %299 = arith.addf %288, %291 : vector<8x26xf32>
    %300 = arith.addf %294, %296 : vector<8x26xf32>
    %301 = arith.addf %297, %298 : vector<8x26xf32>
    %302 = arith.addf %299, %300 : vector<8x26xf32>
    %303 = arith.addf %301, %302 : vector<8x26xf32>
    %304 = math.tanh %303 : vector<8x26xf32>
    %305 = arith.mulf %304, %31 : vector<8x26xf32>
    %cst_19 = arith.constant dense<0.000000e+00> : vector<8xf32>
    %306 = vector.multi_reduction <add>, %305, %cst_19 [1] : vector<8x26xf32> to vector<8xf32>
    %307 = vector.shape_cast %306 : vector<8xf32> to vector<8x1xf32>
    %308 = arith.addf %307, %33 : vector<8x1xf32>
    %309 = tpu.concatenate %77, %110, %143, %176, %209, %242, %275, %308 in 0 : vector<8x1xf32>, vector<8x1xf32>, vector<8x1xf32>, vector<8x1xf32>, vector<8x1xf32>, vector<8x1xf32>, vector<8x1xf32>, vector<8x1xf32> -> vector<64x1xf32>
    %310 = arith.index_cast %42 : i32 to index
    %c0_20 = arith.constant 0 : index
    %311 = vector.load %arg3[%310, %c0_20] : memref<64x1xf32, #tpu.memory_space<vmem>>, vector<64x1xf32>
    tpu.vector_store %arg3[%310, %c0_20], %309 {strides = array<i32>} : memref<64x1xf32, #tpu.memory_space<vmem>>, vector<64x1xf32>,
    %c1_i32 = arith.constant 1 : i32
    %c0_21 = arith.constant 0 : index
    %c0_22 = arith.constant 0 : index
    %312 = vector.load %arg5[%c0_21, %c0_22] : memref<8x26xf32, #tpu.memory_space<vmem>>, vector<8x26xf32>
    tpu.vector_store %arg5[%c0_21, %c0_22], %303 {strides = array<i32>} : memref<8x26xf32, #tpu.memory_space<vmem>>, vector<8x26xf32>,
    %c0_23 = arith.constant 0 : index
    %c0_24 = arith.constant 0 : index
    %313 = vector.load %arg6[%c0_23, %c0_24] : memref<8x1xf32, #tpu.memory_space<vmem>>, vector<8x1xf32>
    tpu.vector_store %arg6[%c0_23, %c0_24], %308 {strides = array<i32>} : memref<8x1xf32, #tpu.memory_space<vmem>>, vector<8x1xf32>,
    return
  }
  func.func @transform_0(%arg0: i32) -> (i32, i32) {
    %c0_i32 = arith.constant 0 : i32
    %c0_i32_0 = arith.constant 0 : i32
    return %arg0, %c0_i32 : i32, i32
  }
  func.func @transform_1(%arg0: i32) -> (i32, i32) {
    %c0_i32 = arith.constant 0 : i32
    %c0_i32_0 = arith.constant 0 : i32
    %c0_i32_1 = arith.constant 0 : i32
    return %c0_i32, %c0_i32_0 : i32, i32
  }
  func.func @transform_2(%arg0: i32) -> (i32, i32) {
    %c0_i32 = arith.constant 0 : i32
    %c0_i32_0 = arith.constant 0 : i32
    return %arg0, %c0_i32 : i32, i32
  }
}

</mosaic_0001>

<llo_original>
// kernel: tpu_custom_call.1
$region0: #{tpu_custom_call.1}
  #allocation0 [shape = 'u32[]', space=smem, size = 0x4, offset = 0x4, fixed_abs, tag = 'smem constant byte address 0x4 - core index']
  #allocation1 [shape = 'u32[144,128]{1,0:T(1,128)}', space=vmem, size = 0x12000, scoped, tag = 'internal scratch']
  #allocation2 [shape = 'f32[64,26]{1,0:T(8,128)}', space=vmem, size = 0x8000, scoped, tag = 'scratch operand']
  #allocation3 [shape = 'f32[8,26]{1,0:T(8,128)}', space=vmem, size = 0x1000, scoped, tag = 'scratch operand']
  #allocation4 [shape = 'f32[8,1]{1,0:T(8,128)}', space=vmem, size = 0x1000, scoped, tag = 'scratch operand']
  %s0 = inlined_call_operand.vmem [shape: f32[192,6], index: 0, kind: input, shape index: {}]
  %s1 = inlined_call_operand.vmem [shape: f32[16,32], index: 1, kind: input, shape index: {}]
  %s2 = inlined_call_operand.vmem [shape: f32[192,1], index: 2, kind: output, shape index: {}]
  %s3 = sld [smem:[#allocation0]]
  $region45: #{tpu_custom_call.1} parent=0
    _
  %s5 = ssub.s32 1, %s3
  %s6 = scalar_select 0, %s5, %s3
  loop: start=0, step=1, limit=5
  $region2: #{tpu_custom_call.1} parent=0 // loop_pre_header
    _
  $region3: #{tpu_custom_call.1} parent=0 // loop_header
    %s8 = sphi 0, %s12
    %p9 = scmp.ge.s32.totalorder %s8, 5
    %s18 = sphi 0, %s20
    %s21 = sphi 0, %s18
    %s22 = sphi 0, %s21
    %s38 = sphi 0, %s22
    %s42 = sphi 0, %s42
    %s44 = sphi 0, %s42
    %s45 = sphi 0, %s44
    %s59 = sphi 0, %s45
    %s65 = sphi 0, %s67
    %s68 = sphi 0, %s65
    %s69 = sphi 0, %s68
    %s85 = sphi 0, %s69
  $region4: #{tpu_custom_call.1} parent=0 // loop_header_branch
    %11 = sbr.rel (%p9) target = $region8
  $region5: #{tpu_custom_call.1} parent=0 // loop_body
    %s13 = ssub.s32 %s8, 1
    %s14 = ssub.s32 %s8, 2
    %s15 = sadd.s32 %s8, 1
    %s16 = ssub.s32 %s8, %s15
    %p17 = scmp.eq.s32.totalorder %s16, 0
    %s19 = sadd.s32 %s18, 1
    %s20 = scalar_select %p17, %s18, %s19
    %p23 = pneg %p17
    %p24 = scmp.eq.s32.totalorder %s8, 2
    %p25 = por %p23, %p24
    %p26 = scmp.ne.s32.totalorder %s18, %s21
    %p27 = scmp.eq.s32.totalorder %s8, 0
    %p28 = por %p26, %p27
    %p29 = scmp.ne.s32.totalorder %s18, %s21
    %p30 = scmp.eq.s32.totalorder %s13, 2
    %p31 = por %p29, %p30
    %p32 = scmp.ne.s32.totalorder %s21, %s22
    %p33 = scmp.eq.s32.totalorder %s13, 0
    %p34 = por %p32, %p33
    %p35 = scmp.ne.s32.totalorder %s21, %s22
    %p36 = scmp.eq.s32.totalorder %s14, 2
    %p37 = por %p35, %p36
    %p39 = scmp.ne.s32.totalorder %s22, %s38
    %p40 = scmp.eq.s32.totalorder %s14, 0
    %p41 = por %p39, %p40
    %s43 = sadd.s32 %s42, 1
    %p46 = scmp.eq.s32.totalorder %s8, 2
    %p47 = scmp.ne.s32.totalorder %s42, %s44
    %p48 = scmp.eq.s32.totalorder %s8, 0
    %p49 = por %p47, %p48
    %p50 = scmp.ne.s32.totalorder %s42, %s44
    %p51 = scmp.eq.s32.totalorder %s13, 2
    %p52 = por %p50, %p51
    %p53 = scmp.ne.s32.totalorder %s44, %s45
    %p54 = scmp.eq.s32.totalorder %s13, 0
    %p55 = por %p53, %p54
    %p56 = scmp.ne.s32.totalorder %s44, %s45
    %p57 = scmp.eq.s32.totalorder %s14, 2
    %p58 = por %p56, %p57
    %p60 = scmp.ne.s32.totalorder %s45, %s59
    %p61 = scmp.eq.s32.totalorder %s14, 0
    %p62 = por %p60, %p61
    %s63 = ssub.s32 %s8, %s15
    %p64 = scmp.eq.s32.totalorder %s63, 0
    %s66 = sadd.s32 %s65, 1
    %s67 = scalar_select %p64, %s65, %s66
    %p70 = pneg %p64
    %p71 = scmp.eq.s32.totalorder %s8, 2
    %p72 = por %p70, %p71
    %p73 = scmp.ne.s32.totalorder %s65, %s68
    %p74 = scmp.eq.s32.totalorder %s8, 0
    %p75 = por %p73, %p74
    %p76 = scmp.ne.s32.totalorder %s65, %s68
    %p77 = scmp.eq.s32.totalorder %s13, 2
    %p78 = por %p76, %p77
    %p79 = scmp.ne.s32.totalorder %s68, %s69
    %p80 = scmp.eq.s32.totalorder %s13, 0
    %p81 = por %p79, %p80
    %p82 = scmp.ne.s32.totalorder %s68, %s69
    %p83 = scmp.eq.s32.totalorder %s14, 2
    %p84 = por %p82, %p83
    %p86 = scmp.ne.s32.totalorder %s69, %s85
    %p87 = scmp.eq.s32.totalorder %s14, 0
    %p88 = por %p86, %p87
    %p89 = scmp.le.s32.totalorder 1, %s8
    %p90 = scmp.lt.s32.totalorder %s8, 4
    %p91 = pnand %p89, %p90
    %p92 = pneg %p91
    // Predicated region
    $region9: #{tpu_custom_call.1} parent=5 // pred_check
      _
    $region10: #{tpu_custom_call.1} parent=5 // pred_check_branch
      %94 = sbr.rel (%p91) target = $region12
    $region11: #{tpu_custom_call.1} parent=5 // pred_region
      %s95 = ssub.s32 %s8, 1
      // Predicated region
      $region13: #{tpu_custom_call.1} parent=11 // pred_check
        %p96 = pneg %p55
      $region14: #{tpu_custom_call.1} parent=11 // pred_check_branch
        %98 = sbr.rel (%p96) target = $region16
      $region15: #{tpu_custom_call.1} parent=11 // pred_region
        _
      $region16: #{tpu_custom_call.1} parent=11 // pred_fallthru
        _
    $region12: #{tpu_custom_call.1} parent=5 // pred_fallthru
      _
    %p99 = scmp.lt.s32.totalorder %s8, 3
    // Predicated region
    $region17: #{tpu_custom_call.1} parent=5 // pred_check
      %p100 = pneg %p99
    $region18: #{tpu_custom_call.1} parent=5 // pred_check_branch
      %102 = sbr.rel (%p100) target = $region20
    $region19: #{tpu_custom_call.1} parent=5 // pred_region
      // Predicated region
      $region21: #{tpu_custom_call.1} parent=19 // pred_check
        %p103 = pneg %p28
      $region22: #{tpu_custom_call.1} parent=19 // pred_check_branch
        %105 = sbr.rel (%p103) target = $region24
      $region23: #{tpu_custom_call.1} parent=19 // pred_region
        %s106 = smul.u32 8, %s8
        %p107 = scmp.lt.s32.totalorder %s106, 23
        %s108 = scalar_select %p107, %s106, 23
        %s109 = smul.addr %s108, 8
        %s110 = scalar_lea.vmem %s0, %s109
        %s111 = smul.u32 8, %s8
      $region24: #{tpu_custom_call.1} parent=19 // pred_fallthru
        _
    $region20: #{tpu_custom_call.1} parent=5 // pred_fallthru
      _
    %p112 = scmp.le.s32.totalorder 1, %s8
    %p113 = scmp.lt.s32.totalorder %s8, 4
    %p114 = pnand %p112, %p113
    %p115 = pneg %p114
    // Predicated region
    $region25: #{tpu_custom_call.1} parent=5 // pred_check
      _
    $region26: #{tpu_custom_call.1} parent=5 // pred_check_branch
      %117 = sbr.rel (%p114) target = $region28
    $region27: #{tpu_custom_call.1} parent=5 // pred_region
      %s118 = ssub.s32 %s8, 1
      %s119 = smul.u32 8, %s13
      %p120 = scmp.lt.s32.totalorder %s119, 23
      %s121 = scalar_select %p120, %s119, 23
      %s122 = smul.addr %s121, 8
      %s123 = scalar_lea.vmem %s0, %s122
      %p124 = pneg %p34
      %p125 = pneg %p31
      %p126 = pneg %p55
      %p127 = pneg %p52
      %p128 = pneg %p81
      %p129 = pneg %p78
      %s130 = smul.u32 8, %s13
      %p131 = scmp.lt.s32.totalorder %s130, 23
      %s132 = scalar_select %p131, %s130, 23
      %s133 = smul.addr %s132, 8
      %s134 = scalar_lea.vmem %s2, %s133
      %s135 = smul.u32 8, %s13
      %p136 = scmp.lt.s32.totalorder %s135, 23
      %s137 = scalar_select %p136, %s135, 23
      %s138 = smul.addr %s137, 8
      %s139 = scalar_lea.vmem %s0, %s138
      %s140 = smul.u32 8, %s13
      %s141 = smul.u32 8, %s13
      %p142 = scmp.lt.s32.totalorder %s141, 23
      %s143 = scalar_select %p142, %s141, 23
      %s144 = smul.addr %s143, 8
      %s145 = scalar_lea.vmem %s2, %s144
      %s146 = smul.u32 8, %s13
      %p147 = scmp.eq.s32.totalorder %s13, 0
      // Predicated region
      $region29: #{tpu_custom_call.1} parent=27 // pred_check
        %p148 = pneg %p147
      $region30: #{tpu_custom_call.1} parent=27 // pred_check_branch
        %150 = sbr.rel (%p148) target = $region32
      $region31: #{tpu_custom_call.1} parent=27 // pred_region
        %vm151 = vcmask 211968
        %152 = vst.msk [vmem:[#allocation3] sm:$0xff] %vm151, 0.0
        %vm153 = vcmask 7168
        %154 = vst.msk [vmem:[#allocation4] sm:$0xff] %vm153, 0.0
      $region32: #{tpu_custom_call.1} parent=27 // pred_fallthru
        _
      %v155 = vld [vmem:[%s1] sm:$0xff]
      %v156 = vld [vmem:[%s1 + $0x8] sm:$0xff]
      %v157 = vlaneseq
      %v158 = vshrl.u32 %v157, 7
      %v159 = vsub.s32 0, %v158
      %v160 = vrot.slane %v155, %v159
      %v161 = vlaneseq
      %v162 = vshrl.u32 %v161, 7
      %v163 = vsub.s32 1, %v162
      %v164 = vrot.slane %v155, %v163
      %v165 = vlaneseq
      %v166 = vshrl.u32 %v165, 7
      %v167 = vsub.s32 2, %v166
      %v168 = vrot.slane %v155, %v167
      %v169 = vlaneseq
      %v170 = vshrl.u32 %v169, 7
      %v171 = vsub.s32 3, %v170
      %v172 = vrot.slane %v155, %v171
      %v173 = vlaneseq
      %v174 = vshrl.u32 %v173, 7
      %v175 = vsub.s32 4, %v174
      %v176 = vrot.slane %v155, %v175
      %v177 = vlaneseq
      %v178 = vshrl.u32 %v177, 7
      %v179 = vsub.s32 5, %v178
      %v180 = vrot.slane %v155, %v179
      %v181 = vlaneseq
      %v182 = vshrl.u32 %v181, 7
      %v183 = vsub.s32 6, %v182
      %v184 = vrot.slane %v155, %v183
      %v185 = vlaneseq
      %v186 = vshrl.u32 %v185, 7
      %v187 = vsub.s32 6, %v186
      %v188 = vrot.slane %v156, %v187
      %v189 = vlaneseq
      %v190 = vshrl.u32 %v189, 7
      %v191 = vsub.s32 7, %v190
      %v192 = vrot.slane %v156, %v191
      %v193 = vld [vmem:[%s139] sm:$0xff]
      %v194 = vld [vmem:[%s139 + $0x8] sm:$0xff]
      %v195 = vld [vmem:[%s139 + $0x10] sm:$0xff]
      %v196 = vld [vmem:[%s139 + $0x18] sm:$0xff]
      %v197 = vld [vmem:[%s139 + $0x20] sm:$0xff]
      %v198 = vld [vmem:[%s139 + $0x28] sm:$0xff]
      %v199 = vld [vmem:[%s139 + $0x30] sm:$0xff]
      %v200 = vld [vmem:[%s139 + $0x38] sm:$0xff]
      %v201 = vlaneseq
      %v202 = vshrl.u32 %v201, 7
      %v203 = vsub.s32 7, %v202
      %v204 = vrot.slane %v155, %v203
      %vm205 = vcmask 48128
      %v207 = vsel %vm205, %v193, 0
      %v210 = vsel %vm205, %v194, 0
      %v213 = vsel %vm205, %v195, 0
      %v216 = vsel %vm205, %v196, 0
      %v219 = vsel %vm205, %v197, 0
      %v222 = vsel %vm205, %v198, 0
      %v225 = vsel %vm205, %v199, 0
      %v228 = vsel %vm205, %v200, 0
      %vm230 = vcmask 1045504
      %v232 = vsel %vm230, %v156, 0
      %234 = vmatprep.subr.mxu0 0.0
      %235 = vmatpush1.msra.mxu0 %v232
      %236 = vmatprep.subr.mxu0 0.0
      %237 = vmatpush1.msra.mxu0 0.0
      %238 = vmatprep.subr.mxu0 0.0
      %239 = vmatpush1.msra.mxu0 0.0
      %240 = vmatprep.subr.mxu0 0.0
      %241 = vmatpush1.msra.mxu0 0.0
      %242 = vmatprep.subr.mxu0 0.0
      %243 = vmatpush1.msra.mxu0 0.0
      %244 = vmatprep.subr.mxu0 0.0
      %245 = vmatpush1.msra.mxu0 0.0
      %246 = vmatprep.subr.mxu0 0.0
      %247 = vmatpush1.msra.mxu0 0.0
      %248 = vmatprep.subr.mxu0 0.0
      %249 = vmatpush1.msra.mxu0 0.0
      %250 = vmatprep.subr.mxu0 0.0
      %251 = vmatpush1.msra.mxu0 0.0
      %252 = vmatprep.subr.mxu0 0.0
      %253 = vmatpush1.msra.mxu0 0.0
      %254 = vmatprep.subr.mxu0 0.0
      %255 = vmatpush1.msra.mxu0 0.0
      %256 = vmatprep.subr.mxu0 0.0
      %257 = vmatpush1.msra.mxu0 0.0
      %258 = vmatprep.subr.mxu0 0.0
      %259 = vmatpush1.msra.mxu0 0.0
      %260 = vmatprep.subr.mxu0 0.0
      %261 = vmatpush1.msra.mxu0 0.0
      %262 = vmatprep.subr.mxu0 0.0
      %263 = vmatpush1.msra.mxu0 0.0
      %264 = vmatprep.subr.mxu0 0.0
      %265 = vmatpush1.msra.mxu0 0.0
      %266 = vmatprep.subr.mxu0 0.0
      %267 = vmatpush1.msra.mxu0 0.0
      %268 = vmatprep.subr.mxu0 0.0
      %269 = vmatpush1.msra.mxu0 0.0
      %270 = vmatprep.subr.mxu0 0.0
      %271 = vmatpush1.msra.mxu0 0.0
      %272 = vmatprep.subr.mxu0 0.0
      %273 = vmatpush1.msra.mxu0 0.0
      %274 = vmatprep.subr.mxu0 0.0
      %275 = vmatpush1.msra.mxu0 0.0
      %276 = vmatprep.subr.mxu0 0.0
      %277 = vmatpush1.msra.mxu0 0.0
      %278 = vmatprep.subr.mxu0 0.0
      %279 = vmatpush1.msra.mxu0 0.0
      %280 = vmatprep.subr.mxu0 0.0
      %281 = vmatpush1.msra.mxu0 0.0
      %282 = vmatprep.subr.mxu0 0.0
      %283 = vmatpush1.msra.mxu0 0.0
      %284 = vmatprep.subr.mxu0 0.0
      %285 = vmatpush1.msra.mxu0 0.0
      %286 = vmatprep.subr.mxu0 0.0
      %287 = vmatpush1.msra.mxu0 0.0
      %288 = vmatprep.subr.mxu0 0.0
      %289 = vmatpush1.msra.mxu0 0.0
      %290 = vmatprep.subr.mxu0 0.0
      %291 = vmatpush1.msra.mxu0 0.0
      %292 = vmatprep.subr.mxu0 0.0
      %293 = vmatpush1.msra.mxu0 0.0
      %294 = vmatprep.subr.mxu0 0.0
      %295 = vmatpush1.msra.mxu0 0.0
      %296 = vmatprep.subr.mxu0 0.0
      %297 = vmatpush1.msra.mxu0 0.0
      %298 = vmatprep.mubr.f32.mxu0 0.0
      %299 = vmatmul.mubr.f32.gmra.mrb[0].mxu0 %v207
      %v300 = vpop.f32.mrb[0].mxu0
      %v301 = vadd.f32 %v204, %v300
      %v302 = vpop.f32.mrb[0].mxu0
      %303 = vmatprep.mubr.f32.mxu0 0.0
      %304 = vmatmul.mubr.f32.gmra.mrb[0].mxu0 %v210
      %v305 = vpop.f32.mrb[0].mxu0
      %v306 = vadd.f32 %v204, %v305
      %v307 = vpop.f32.mrb[0].mxu0
      %308 = vmatprep.mubr.f32.mxu0 0.0
      %309 = vmatmul.mubr.f32.gmra.mrb[0].mxu0 %v213
      %v310 = vpop.f32.mrb[0].mxu0
      %v311 = vadd.f32 %v204, %v310
      %v312 = vpop.f32.mrb[0].mxu0
      %313 = vmatprep.mubr.f32.mxu0 0.0
      %314 = vmatmul.mubr.f32.gmra.mrb[0].mxu0 %v216
      %v315 = vpop.f32.mrb[0].mxu0
      %v316 = vadd.f32 %v204, %v315
      %v317 = vpop.f32.mrb[0].mxu0
      %318 = vmatprep.mubr.f32.mxu0 0.0
      %319 = vmatmul.mubr.f32.gmra.mrb[0].mxu0 %v219
      %v320 = vpop.f32.mrb[0].mxu0
      %v321 = vadd.f32 %v204, %v320
      %v322 = vpop.f32.mrb[0].mxu0
      %323 = vmatprep.mubr.f32.mxu0 0.0
      %324 = vmatmul.mubr.f32.gmra.mrb[0].mxu0 %v222
      %v325 = vpop.f32.mrb[0].mxu0
      %v326 = vadd.f32 %v204, %v325
      %v327 = vpop.f32.mrb[0].mxu0
      %328 = vmatprep.mubr.f32.mxu0 0.0
      %329 = vmatmul.mubr.f32.gmra.mrb[0].mxu0 %v225
      %v330 = vpop.f32.mrb[0].mxu0
      %v331 = vadd.f32 %v204, %v330
      %v332 = vpop.f32.mrb[0].mxu0
      %333 = vmatprep.mubr.f32.mxu0 0.0
      %334 = vmatmul.mubr.f32.gmra.mrb[0].mxu0 %v228
      %v335 = vpop.f32.mrb[0].mxu0
      %v336 = vadd.f32 %v204, %v335
      %v337 = vpop.f32.mrb[0].mxu0
      %338 = vdwg.mxu0
      %vm339 = vcmask 211968
      %340 = vst.msk [vmem:[#allocation2] sm:$0xff] %vm339, %v301
      %341 = vst.msk [vmem:[#allocation2 + $0x8] sm:$0xff] %vm339, %v306
      %342 = vst.msk [vmem:[#allocation2 + $0x10] sm:$0xff] %vm339, %v311
      %343 = vst.msk [vmem:[#allocation2 + $0x18] sm:$0xff] %vm339, %v316
      %344 = vst.msk [vmem:[#allocation2 + $0x20] sm:$0xff] %vm339, %v321
      %345 = vst.msk [vmem:[#allocation2 + $0x28] sm:$0xff] %vm339, %v326
      %346 = vst.msk [vmem:[#allocation2 + $0x30] sm:$0xff] %vm339, %v331
      %347 = vst.msk [vmem:[#allocation2 + $0x38] sm:$0xff] %vm339, %v336
      %v348 = vld [vmem:[#allocation3] sm:$0xff]
      %v349 = vld [vmem:[#allocation4] sm:$0xff]
      %v350 = vld [vmem:[#allocation2] sm:$0xff]
      %v351 = vld [vmem:[#allocation2 + $0x8] sm:$0xff]
      %v352 = vld [vmem:[#allocation2 + $0x10] sm:$0xff]
      %v353 = vld [vmem:[#allocation2 + $0x18] sm:$0xff]
      %v354 = vld [vmem:[#allocation2 + $0x20] sm:$0xff]
      %v355 = vld [vmem:[#allocation2 + $0x28] sm:$0xff]
      %v356 = vld [vmem:[#allocation2 + $0x30] sm:$0xff]
      %v357 = vld [vmem:[#allocation2 + $0x38] sm:$0xff]
      %359 = vset.pattern.permute.xlu0 20
      %360 = vperm.xlu0 %359, %v348
      %v361 = vpop.permute.xlu0 %360
      %v363 = vmul.f32 %v361, %v160
      %364 = vset.pattern.permute.xlu0 21
      %365 = vperm.xlu0 %364, %v348
      %v366 = vpop.permute.xlu0 %365
      %v368 = vmul.f32 %v366, %v164
      %369 = vset.pattern.permute.xlu0 22
      %370 = vperm.xlu0 %369, %v348
      %v371 = vpop.permute.xlu0 %370
      %v373 = vmul.f32 %v371, %v168
      %374 = vset.pattern.permute.xlu0 23
      %375 = vperm.xlu0 %374, %v348
      %v376 = vpop.permute.xlu0 %375
      %v378 = vmul.f32 %v376, %v172
      %379 = vset.pattern.permute.xlu0 24
      %380 = vperm.xlu0 %379, %v348
      %v381 = vpop.permute.xlu0 %380
      %v383 = vmul.f32 %v381, %v176
      %384 = vset.pattern.permute.xlu0 25
      %385 = vperm.xlu0 %384, %v348
      %v386 = vpop.permute.xlu0 %385
      %v388 = vmul.f32 %v386, %v180
      %390 = vset.pattern.permute.xlu0 0
      %391 = vperm.xlu0 %390, %v349
      %v392 = vpop.permute.xlu0 %391
      %v394 = vmul.f32 %v392, %v184
      %v395 = vadd.f32 %v350, %v363
      %v396 = vadd.f32 %v368, %v373
      %v397 = vadd.f32 %v378, %v383
      %v398 = vadd.f32 %v388, %v394
      %v399 = vadd.f32 %v395, %v396
      %v400 = vadd.f32 %v397, %v398
      %v401 = vadd.f32 %v399, %v400
      %v402 = vtanh.pop %v401
      %v403 = vmul.f32 %v402, %v188
      %v404 = vsel %vm339, %v403, 0.0
      %405 = vadd.xlane.f32.xlu0 %v404
      %v406 = vpop.xlane.xlu0 %405
      %v407 = vadd.f32 %v406, %v192
      %409 = vset.pattern.permute.xlu0 20
      %410 = vperm.xlu0 %409, %v401
      %v411 = vpop.permute.xlu0 %410
      %v413 = vmul.f32 %v411, %v160
      %414 = vset.pattern.permute.xlu0 21
      %415 = vperm.xlu0 %414, %v401
      %v416 = vpop.permute.xlu0 %415
      %v418 = vmul.f32 %v416, %v164
      %419 = vset.pattern.permute.xlu0 22
      %420 = vperm.xlu0 %419, %v401
      %v421 = vpop.permute.xlu0 %420
      %v423 = vmul.f32 %v421, %v168
      %424 = vset.pattern.permute.xlu0 23
      %425 = vperm.xlu0 %424, %v401
      %v426 = vpop.permute.xlu0 %425
      %v428 = vmul.f32 %v426, %v172
      %429 = vset.pattern.permute.xlu0 24
      %430 = vperm.xlu0 %429, %v401
      %v431 = vpop.permute.xlu0 %430
      %v433 = vmul.f32 %v431, %v176
      %434 = vset.pattern.permute.xlu0 25
      %435 = vperm.xlu0 %434, %v401
      %v436 = vpop.permute.xlu0 %435
      %v438 = vmul.f32 %v436, %v180
      %440 = vset.pattern.permute.xlu0 0
      %441 = vperm.xlu0 %440, %v407
      %v442 = vpop.permute.xlu0 %441
      %v444 = vmul.f32 %v442, %v184
      %v445 = vadd.f32 %v351, %v413
      %v446 = vadd.f32 %v418, %v423
      %v447 = vadd.f32 %v428, %v433
      %v448 = vadd.f32 %v438, %v444
      %v449 = vadd.f32 %v445, %v446
      %v450 = vadd.f32 %v447, %v448
      %v451 = vadd.f32 %v449, %v450
      %v452 = vtanh.pop %v451
      %v453 = vmul.f32 %v452, %v188
      %v454 = vsel %vm339, %v453, 0.0
      %455 = vadd.xlane.f32.xlu0 %v454
      %v456 = vpop.xlane.xlu0 %455
      %v457 = vadd.f32 %v456, %v192
      %459 = vset.pattern.permute.xlu0 20
      %460 = vperm.xlu0 %459, %v451
      %v461 = vpop.permute.xlu0 %460
      %v463 = vmul.f32 %v461, %v160
      %464 = vset.pattern.permute.xlu0 21
      %465 = vperm.xlu0 %464, %v451
      %v466 = vpop.permute.xlu0 %465
      %v468 = vmul.f32 %v466, %v164
      %469 = vset.pattern.permute.xlu0 22
      %470 = vperm.xlu0 %469, %v451
      %v471 = vpop.permute.xlu0 %470
      %v473 = vmul.f32 %v471, %v168
      %474 = vset.pattern.permute.xlu0 23
      %475 = vperm.xlu0 %474, %v451
      %v476 = vpop.permute.xlu0 %475
      %v478 = vmul.f32 %v476, %v172
      %479 = vset.pattern.permute.xlu0 24
      %480 = vperm.xlu0 %479, %v451
      %v481 = vpop.permute.xlu0 %480
      %v483 = vmul.f32 %v481, %v176
      %484 = vset.pattern.permute.xlu0 25
      %485 = vperm.xlu0 %484, %v451
      %v486 = vpop.permute.xlu0 %485
      %v488 = vmul.f32 %v486, %v180
      %490 = vset.pattern.permute.xlu0 0
      %491 = vperm.xlu0 %490, %v457
      %v492 = vpop.permute.xlu0 %491
      %v494 = vmul.f32 %v492, %v184
      %v495 = vadd.f32 %v352, %v463
      %v496 = vadd.f32 %v468, %v473
      %v497 = vadd.f32 %v478, %v483
      %v498 = vadd.f32 %v488, %v494
      %v499 = vadd.f32 %v495, %v496
      %v500 = vadd.f32 %v497, %v498
      %v501 = vadd.f32 %v499, %v500
      %v502 = vtanh.pop %v501
      %v503 = vmul.f32 %v502, %v188
      %v504 = vsel %vm339, %v503, 0.0
      %505 = vadd.xlane.f32.xlu0 %v504
      %v506 = vpop.xlane.xlu0 %505
      %v507 = vadd.f32 %v506, %v192
      %509 = vset.pattern.permute.xlu0 20
      %510 = vperm.xlu0 %509, %v501
      %v511 = vpop.permute.xlu0 %510
      %v513 = vmul.f32 %v511, %v160
      %514 = vset.pattern.permute.xlu0 21
      %515 = vperm.xlu0 %514, %v501
      %v516 = vpop.permute.xlu0 %515
      %v518 = vmul.f32 %v516, %v164
      %519 = vset.pattern.permute.xlu0 22
      %520 = vperm.xlu0 %519, %v501
      %v521 = vpop.permute.xlu0 %520
      %v523 = vmul.f32 %v521, %v168
      %524 = vset.pattern.permute.xlu0 23
      %525 = vperm.xlu0 %524, %v501
      %v526 = vpop.permute.xlu0 %525
      %v528 = vmul.f32 %v526, %v172
      %529 = vset.pattern.permute.xlu0 24
      %530 = vperm.xlu0 %529, %v501
      %v531 = vpop.permute.xlu0 %530
      %v533 = vmul.f32 %v531, %v176
      %534 = vset.pattern.permute.xlu0 25
      %535 = vperm.xlu0 %534, %v501
      %v536 = vpop.permute.xlu0 %535
      %v538 = vmul.f32 %v536, %v180
      %540 = vset.pattern.permute.xlu0 0
      %541 = vperm.xlu0 %540, %v507
      %v542 = vpop.permute.xlu0 %541
      %v544 = vmul.f32 %v542, %v184
      %v545 = vadd.f32 %v353, %v513
      %v546 = vadd.f32 %v518, %v523
      %v547 = vadd.f32 %v528, %v533
      %v548 = vadd.f32 %v538, %v544
      %v549 = vadd.f32 %v545, %v546
      %v550 = vadd.f32 %v547, %v548
      %v551 = vadd.f32 %v549, %v550
      %v552 = vtanh.pop %v551
      %v553 = vmul.f32 %v552, %v188
      %v554 = vsel %vm339, %v553, 0.0
      %555 = vadd.xlane.f32.xlu0 %v554
      %v556 = vpop.xlane.xlu0 %555
      %v557 = vadd.f32 %v556, %v192
      %559 = vset.pattern.permute.xlu0 20
      %560 = vperm.xlu0 %559, %v551
      %v561 = vpop.permute.xlu0 %560
      %v563 = vmul.f32 %v561, %v160
      %564 = vset.pattern.permute.xlu0 21
      %565 = vperm.xlu0 %564, %v551
      %v566 = vpop.permute.xlu0 %565
      %v568 = vmul.f32 %v566, %v164
      %569 = vset.pattern.permute.xlu0 22
      %570 = vperm.xlu0 %569, %v551
      %v571 = vpop.permute.xlu0 %570
      %v573 = vmul.f32 %v571, %v168
      %574 = vset.pattern.permute.xlu0 23
      %575 = vperm.xlu0 %574, %v551
      %v576 = vpop.permute.xlu0 %575
      %v578 = vmul.f32 %v576, %v172
      %579 = vset.pattern.permute.xlu0 24
      %580 = vperm.xlu0 %579, %v551
      %v581 = vpop.permute.xlu0 %580
      %v583 = vmul.f32 %v581, %v176
      %584 = vset.pattern.permute.xlu0 25
      %585 = vperm.xlu0 %584, %v551
      %v586 = vpop.permute.xlu0 %585
      %v588 = vmul.f32 %v586, %v180
      %590 = vset.pattern.permute.xlu0 0
      %591 = vperm.xlu0 %590, %v557
      %v592 = vpop.permute.xlu0 %591
      %v594 = vmul.f32 %v592, %v184
      %v595 = vadd.f32 %v354, %v563
      %v596 = vadd.f32 %v568, %v573
      %v597 = vadd.f32 %v578, %v583
      %v598 = vadd.f32 %v588, %v594
      %v599 = vadd.f32 %v595, %v596
      %v600 = vadd.f32 %v597, %v598
      %v601 = vadd.f32 %v599, %v600
      %v602 = vtanh.pop %v601
      %v603 = vmul.f32 %v602, %v188
      %v604 = vsel %vm339, %v603, 0.0
      %605 = vadd.xlane.f32.xlu0 %v604
      %v606 = vpop.xlane.xlu0 %605
      %v607 = vadd.f32 %v606, %v192
      %609 = vset.pattern.permute.xlu0 20
      %610 = vperm.xlu0 %609, %v601
      %v611 = vpop.permute.xlu0 %610
      %v613 = vmul.f32 %v611, %v160
      %614 = vset.pattern.permute.xlu0 21
      %615 = vperm.xlu0 %614, %v601
      %v616 = vpop.permute.xlu0 %615
      %v618 = vmul.f32 %v616, %v164
      %619 = vset.pattern.permute.xlu0 22
      %620 = vperm.xlu0 %619, %v601
      %v621 = vpop.permute.xlu0 %620
      %v623 = vmul.f32 %v621, %v168
      %624 = vset.pattern.permute.xlu0 23
      %625 = vperm.xlu0 %624, %v601
      %v626 = vpop.permute.xlu0 %625
      %v628 = vmul.f32 %v626, %v172
      %629 = vset.pattern.permute.xlu0 24
      %630 = vperm.xlu0 %629, %v601
      %v631 = vpop.permute.xlu0 %630
      %v633 = vmul.f32 %v631, %v176
      %634 = vset.pattern.permute.xlu0 25
      %635 = vperm.xlu0 %634, %v601
      %v636 = vpop.permute.xlu0 %635
      %v638 = vmul.f32 %v636, %v180
      %640 = vset.pattern.permute.xlu0 0
      %641 = vperm.xlu0 %640, %v607
      %v642 = vpop.permute.xlu0 %641
      %v644 = vmul.f32 %v642, %v184
      %v645 = vadd.f32 %v355, %v613
      %v646 = vadd.f32 %v618, %v623
      %v647 = vadd.f32 %v628, %v633
      %v648 = vadd.f32 %v638, %v644
      %v649 = vadd.f32 %v645, %v646
      %v650 = vadd.f32 %v647, %v648
      %v651 = vadd.f32 %v649, %v650
      %v652 = vtanh.pop %v651
      %v653 = vmul.f32 %v652, %v188
      %v654 = vsel %vm339, %v653, 0.0
      %655 = vadd.xlane.f32.xlu0 %v654
      %v656 = vpop.xlane.xlu0 %655
      %v657 = vadd.f32 %v656, %v192
      %659 = vset.pattern.permute.xlu0 20
      %660 = vperm.xlu0 %659, %v651
      %v661 = vpop.permute.xlu0 %660
      %v663 = vmul.f32 %v661, %v160
      %664 = vset.pattern.permute.xlu0 21
      %665 = vperm.xlu0 %664, %v651
      %v666 = vpop.permute.xlu0 %665
      %v668 = vmul.f32 %v666, %v164
      %669 = vset.pattern.permute.xlu0 22
      %670 = vperm.xlu0 %669, %v651
      %v671 = vpop.permute.xlu0 %670
      %v673 = vmul.f32 %v671, %v168
      %674 = vset.pattern.permute.xlu0 23
      %675 = vperm.xlu0 %674, %v651
      %v676 = vpop.permute.xlu0 %675
      %v678 = vmul.f32 %v676, %v172
      %679 = vset.pattern.permute.xlu0 24
      %680 = vperm.xlu0 %679, %v651
      %v681 = vpop.permute.xlu0 %680
      %v683 = vmul.f32 %v681, %v176
      %684 = vset.pattern.permute.xlu0 25
      %685 = vperm.xlu0 %684, %v651
      %v686 = vpop.permute.xlu0 %685
      %v688 = vmul.f32 %v686, %v180
      %690 = vset.pattern.permute.xlu0 0
      %691 = vperm.xlu0 %690, %v657
      %v692 = vpop.permute.xlu0 %691
      %v694 = vmul.f32 %v692, %v184
      %v695 = vadd.f32 %v356, %v663
      %v696 = vadd.f32 %v668, %v673
      %v697 = vadd.f32 %v678, %v683
      %v698 = vadd.f32 %v688, %v694
      %v699 = vadd.f32 %v695, %v696
      %v700 = vadd.f32 %v697, %v698
      %v701 = vadd.f32 %v699, %v700
      %v702 = vtanh.pop %v701
      %v703 = vmul.f32 %v702, %v188
      %v704 = vsel %vm339, %v703, 0.0
      %705 = vadd.xlane.f32.xlu0 %v704
      %v706 = vpop.xlane.xlu0 %705
      %v707 = vadd.f32 %v706, %v192
      %709 = vset.pattern.permute.xlu0 20
      %710 = vperm.xlu0 %709, %v701
      %v711 = vpop.permute.xlu0 %710
      %v713 = vmul.f32 %v711, %v160
      %714 = vset.pattern.permute.xlu0 21
      %715 = vperm.xlu0 %714, %v701
      %v716 = vpop.permute.xlu0 %715
      %v718 = vmul.f32 %v716, %v164
      %719 = vset.pattern.permute.xlu0 22
      %720 = vperm.xlu0 %719, %v701
      %v721 = vpop.permute.xlu0 %720
      %v723 = vmul.f32 %v721, %v168
      %724 = vset.pattern.permute.xlu0 23
      %725 = vperm.xlu0 %724, %v701
      %v726 = vpop.permute.xlu0 %725
      %v728 = vmul.f32 %v726, %v172
      %729 = vset.pattern.permute.xlu0 24
      %730 = vperm.xlu0 %729, %v701
      %v731 = vpop.permute.xlu0 %730
      %v733 = vmul.f32 %v731, %v176
      %734 = vset.pattern.permute.xlu0 25
      %735 = vperm.xlu0 %734, %v701
      %v736 = vpop.permute.xlu0 %735
      %v738 = vmul.f32 %v736, %v180
      %740 = vset.pattern.permute.xlu0 0
      %741 = vperm.xlu0 %740, %v707
      %v742 = vpop.permute.xlu0 %741
      %v744 = vmul.f32 %v742, %v184
      %v745 = vadd.f32 %v357, %v713
      %v746 = vadd.f32 %v718, %v723
      %v747 = vadd.f32 %v728, %v733
      %v748 = vadd.f32 %v738, %v744
      %v749 = vadd.f32 %v745, %v746
      %v750 = vadd.f32 %v747, %v748
      %v751 = vadd.f32 %v749, %v750
      %v752 = vtanh.pop %v751
      %v753 = vmul.f32 %v752, %v188
      %v754 = vsel %vm339, %v753, 0.0
      %755 = vadd.xlane.f32.xlu0 %v754
      %v756 = vpop.xlane.xlu0 %755
      %v757 = vadd.f32 %v756, %v192
      %vm758 = vcmask 7168
      %759 = vst.msk [vmem:[%s145] sm:$0xff] %vm758, %v407
      %760 = vst.msk [vmem:[%s145 + $0x8] sm:$0xff] %vm758, %v457
      %761 = vst.msk [vmem:[%s145 + $0x10] sm:$0xff] %vm758, %v507
      %762 = vst.msk [vmem:[%s145 + $0x18] sm:$0xff] %vm758, %v557
      %763 = vst.msk [vmem:[%s145 + $0x20] sm:$0xff] %vm758, %v607
      %764 = vst.msk [vmem:[%s145 + $0x28] sm:$0xff] %vm758, %v657
      %765 = vst.msk [vmem:[%s145 + $0x30] sm:$0xff] %vm758, %v707
      %766 = vst.msk [vmem:[%s145 + $0x38] sm:$0xff] %vm758, %v757
      %767 = vst.msk [vmem:[#allocation3] sm:$0xff] %vm339, %v751
      %768 = vst.msk [vmem:[#allocation4] sm:$0xff] %vm758, %v757
      %s769 = smul.u32 8, %s13
      %p770 = scmp.lt.s32.totalorder %s769, 23
      %s771 = scalar_select %p770, %s769, 23
      %s772 = smul.addr %s771, 8
      %s773 = scalar_lea.vmem %s2, %s772
      // Predicated region
      $region33: #{tpu_custom_call.1} parent=27 // pred_check
        %p774 = pneg %p78
      $region34: #{tpu_custom_call.1} parent=27 // pred_check_branch
        %776 = sbr.rel (%p774) target = $region36
      $region35: #{tpu_custom_call.1} parent=27 // pred_region
        %s777 = smul.u32 8, %s13
      $region36: #{tpu_custom_call.1} parent=27 // pred_fallthru
        _
    $region28: #{tpu_custom_call.1} parent=5 // pred_fallthru
      _
    %p778 = scmp.le.s32.totalorder 2, %s8
    // Predicated region
    $region37: #{tpu_custom_call.1} parent=5 // pred_check
      %p779 = pneg %p778
    $region38: #{tpu_custom_call.1} parent=5 // pred_check_branch
      %781 = sbr.rel (%p779) target = $region40
    $region39: #{tpu_custom_call.1} parent=5 // pred_region
      %s782 = ssub.s32 %s8, 2
      // Predicated region
      $region41: #{tpu_custom_call.1} parent=39 // pred_check
        %p783 = pneg %p84
      $region42: #{tpu_custom_call.1} parent=39 // pred_check_branch
        %785 = sbr.rel (%p783) target = $region44
      $region43: #{tpu_custom_call.1} parent=39 // pred_region
        %s786 = smul.u32 8, %s14
        %p787 = scmp.lt.s32.totalorder %s786, 23
        %s788 = scalar_select %p787, %s786, 23
        %s789 = smul.addr %s788, 8
        %s790 = scalar_lea.vmem %s2, %s789
      $region44: #{tpu_custom_call.1} parent=39 // pred_fallthru
        _
    $region40: #{tpu_custom_call.1} parent=5 // pred_fallthru
      _
  $region6: #{tpu_custom_call.1} parent=0 // loop_footer
    %s12 = sadd.s32 1, %s8
  $region7: #{tpu_custom_call.1} parent=0 // loop_footer_branch
    %7 = sbr.rel target = $region3
  $region8: #{tpu_custom_call.1} parent=0 // loop_exit
    _

</llo_original>
